<compile_context>
chip_gen: v5e
topology: v5e:2x2
jax: 0.10.0
libtpu: 0.0.40
codegen_flags: <defaults>
</compile_context>

<pallas_src>
import math

import jax
import jax.numpy as jnp
from jax.experimental import pallas as pl
from jax.experimental.pallas import tpu as pltpu

_LANE = 128


def _round_up(x, m):
    return ((x + m - 1) // m) * m


# --------------------------------------------------------------- kernels ----

def _lin_relu_kernel_1k(x_ref, w_ref, b_ref, o_ref):
    # Single K step: o = relu(x @ w + b); no accumulator round-trip, no branches.
    o_ref[...] = jnp.maximum(
        jnp.dot(x_ref[...], w_ref[...], preferred_element_type=jnp.float32)
        + b_ref[...], 0.0).astype(o_ref.dtype)


def _lin_relu_kernel_multik(x_ref, w_ref, b_ref, o_ref):
    # K-streamed: accumulate directly into the resident f32 output block
    # (no VMEM scratch); bias + ReLU fused into the last K step.
    k = pl.program_id(2)

    @pl.when(k == 0)
    def _():
        o_ref[...] = jnp.zeros_like(o_ref)

    o_ref[...] += jnp.dot(x_ref[...], w_ref[...],
                          preferred_element_type=jnp.float32)

    @pl.when(k == pl.num_programs(2) - 1)
    def _():
        o_ref[...] = jnp.maximum(o_ref[...] + b_ref[...],
                                 0.0).astype(o_ref.dtype)


# --------------------------------------------------------------- wrapper ----

def make_lin2(weight, bias, *, tm_cap=512, tn_cap=512, tk=None,
              vmem_budget_bytes=20 * 1024 * 1024):
    """Build forward(x) = relu(x @ weight + bias) with init-time padding.

    weight: (d_in, d_out) f32 (== torch lin1.weight.T); bias: (d_out,) f32.
    All weight-side padding / reshaping happens here, once, not per call.
    """
    d_in, d_out = weight.shape
    assert bias.shape == (d_out,)
    itemsize = jnp.dtype(jnp.float32).itemsize

    tn = d_out if d_out <= tn_cap else tn_cap

    def _fits(tk_):
        # 2x double-buffered input tiles + resident output tile + bias tiles.
        return (2 * (tm_cap * tk_ + tk_ * tn)
                + tm_cap * tn + 2 * tn) * itemsize <= vmem_budget_bytes

    if tk is None:
        if _fits(d_in):
            tk = d_in                       # whole K in one step
        else:
            avail = vmem_budget_bytes // itemsize - tm_cap * tn - 2 * tn
            tk = max(_LANE, (avail // (2 * (tm_cap + tn))) // _LANE * _LANE)

    if tk >= d_in:
        # Single K step: blocks span the full K dim, so no padding is needed
        # (full-extent block dims are exempt from the (8,128) divisibility rule).
        tk = d_in
        k_p = d_in
        k_steps = 1
    else:
        tk = max(_LANE, (tk // _LANE) * _LANE)   # streamed K must be lane-aligned
        k_p = _round_up(d_in, tk)
        k_steps = k_p // tk

    # K-axis zero pad (zeros contribute nothing to the reduction), hoisted to
    # init time.  No N padding: partial edge blocks are handled by Pallas and
    # their garbage only lands in discarded output columns.
    if k_p != d_in:
        w_prep = jnp.zeros((k_p, d_out), weight.dtype).at[:d_in, :].set(weight)
    else:
        w_prep = weight
    bias2d = bias.reshape(1, d_out)

    n_blocks = pl.cdiv(d_out, tn)

    # TODO(synk): optional bf16 cast of x/w tiles (keeping f32 accumulation)
    # would roughly halve input DMA bytes on v6e/v7x, at some accuracy cost.

    def forward(x):
        orig_shape = x.shape
        assert orig_shape[-1] == d_in
        x2 = x.reshape(-1, d_in)
        m = x2.shape[0]

        # Full-M block for small batches -> weights stream from HBM once.
        tm = m if m <= tm_cap else tm_cap
        m_blocks = pl.cdiv(m, tm)

        if k_p != d_in:
            x2 = jnp.zeros((m, k_p), x2.dtype).at[:, :d_in].set(x2)

        cost = pl.CostEstimate(
            flops=2 * m * d_out * d_in,
            transcendentals=0,
            bytes_accessed=itemsize * (m * d_in + d_in * d_out
                                       + m * d_out + d_out),
        )

        est_vmem = (2 * (tm * tk + tk * tn) + tm * tn + 2 * tn) * itemsize
        vmem_limit = 48 * 1024 * 1024 if est_vmem > 12 * 1024 * 1024 else None

        if k_steps == 1:
            grid = (m_blocks, n_blocks)
            in_specs = [
                pl.BlockSpec((tm, d_in), lambda i, j: (i, 0)),
                pl.BlockSpec((d_in, tn), lambda i, j: (0, j)),
                pl.BlockSpec((1, tn), lambda i, j: (0, j)),
            ]
            out_spec = pl.BlockSpec((tm, tn), lambda i, j: (i, j))
            kernel = _lin_relu_kernel_1k
            dims = ("parallel", "parallel")
        else:
            grid = (m_blocks, n_blocks, k_steps)
            in_specs = [
                pl.BlockSpec((tm, tk), lambda i, j, k: (i, k)),
                pl.BlockSpec((tk, tn), lambda i, j, k: (k, j)),
                pl.BlockSpec((1, tn), lambda i, j, k: (0, j)),
            ]
            out_spec = pl.BlockSpec((tm, tn), lambda i, j, k: (i, j))
            kernel = _lin_relu_kernel_multik
            dims = ("parallel", "parallel", "arbitrary")

        out = pl.pallas_call(
            kernel,
            out_shape=jax.ShapeDtypeStruct((m, d_out), jnp.float32),
            grid_spec=pltpu.PrefetchScalarGridSpec(
                num_scalar_prefetch=0,
                grid=grid,
                in_specs=in_specs,
                out_specs=out_spec,
            ),
            compiler_params=pltpu.CompilerParams(
                dimension_semantics=dims,
                vmem_limit_bytes=vmem_limit,
            ),
            cost_estimate=cost,
        )(x2, w_prep, bias2d)

        return out.reshape(*orig_shape[:-1], d_out)

    return forward


def lin2_forward(x, weight, bias, **kwargs):
    """Convenience one-shot call (prefer make_lin2 for repeated calls)."""
    return make_lin2(weight, bias, **kwargs)(x)


if __name__ == "__main__":
    key = jax.random.PRNGKey(0)
    k_x, k_w, k_b, k_x2, k_w2, k_b2 = jax.random.split(key, 6)

    # --- Case 1: module-sized shapes; single-K fast path, zero padding. ------
    INPUT_DIM, OUTPUT_DIM = 16, 32
    LEAD = (4, 8)  # arbitrary leading dims, flattened to 32 rows in one call

    x = jax.random.normal(k_x, (*LEAD, INPUT_DIM), dtype=jnp.float32)
    # torch nn.Linear default init: U(-1/sqrt(fan_in), 1/sqrt(fan_in))
    bound = 1.0 / math.sqrt(INPUT_DIM)
    weight = jax.random.uniform(k_w, (INPUT_DIM, OUTPUT_DIM), jnp.float32,
                                -bound, bound)
    bias = jax.random.uniform(k_b, (OUTPUT_DIM,), jnp.float32, -bound, bound)

    fwd = make_lin2(weight, bias)
    out = jax.block_until_ready(fwd(x))

    ref = jnp.maximum(
        jnp.dot(x.reshape(-1, INPUT_DIM), weight,
                precision=jax.lax.Precision.HIGHEST) + bias, 0.0
    ).reshape(*LEAD, OUTPUT_DIM)
    assert out.shape == (*LEAD, OUTPUT_DIM)
    assert jnp.allclose(out, ref, atol=1e-5, rtol=1e-5)

    # --- Case 2: force the K-streamed path (multi-step grid + K zero-pad). ---
    D_IN2, D_OUT2, M2 = 200, 96, 64
    x_b = jax.random.normal(k_x2, (M2, D_IN2), dtype=jnp.float32)
    w_b = jax.random.normal(k_w2, (D_IN2, D_OUT2), dtype=jnp.float32) * 0.05
    b_b = jax.random.normal(k_b2, (D_OUT2,), dtype=jnp.float32)

    out2 = jax.block_until_ready(lin2_forward(x_b, w_b, b_b, tk=128))
    ref2 = jnp.maximum(
        jnp.dot(x_b, w_b, precision=jax.lax.Precision.HIGHEST) + b_b, 0.0)
    assert out2.shape == (M2, D_OUT2)
    assert jnp.allclose(out2, ref2, atol=1e-4, rtol=1e-4)

    print("KERNEL_OK")
</pallas_src>

<mosaic_0001>
module attributes {stable_mosaic.version = 11 : i64} {
  func.func @_lin_relu_kernel_1k(%arg0: i32, %arg1: i32, %arg2: memref<32x16xf32, #tpu.memory_space<vmem>>, %arg3: memref<16x32xf32, #tpu.memory_space<vmem>>, %arg4: memref<1x32xf32, #tpu.memory_space<vmem>>, %arg5: memref<32x32xf32, #tpu.memory_space<vmem>>) attributes {dimension_semantics = [#tpu.dimension_semantics<parallel>, #tpu.dimension_semantics<parallel>], iteration_bounds = array<i64: 1, 1>, scalar_prefetch = 0 : i64, scratch_operands = 0 : i64, tpu.core_type = #tpu.core_type<tc>, window_params = [{transform_indices = @transform_0, window_bounds = array<i64: 32, 16>}, {transform_indices = @transform_1, window_bounds = array<i64: 16, 32>}, {transform_indices = @transform_2, window_bounds = array<i64: 1, 32>}, {transform_indices = @transform_3, window_bounds = array<i64: 32, 32>}]} {
    %c0 = arith.constant 0 : index
    %c0_0 = arith.constant 0 : index
    %0 = vector.load %arg2[%c0, %c0_0] : memref<32x16xf32, #tpu.memory_space<vmem>>, vector<32x16xf32>
    %c0_1 = arith.constant 0 : index
    %c0_2 = arith.constant 0 : index
    %1 = vector.load %arg3[%c0_1, %c0_2] : memref<16x32xf32, #tpu.memory_space<vmem>>, vector<16x32xf32>
    %cst = arith.constant dense<0.000000e+00> : vector<32x32xf32>
    %2 = tpu.matmul %0, %1, %cst {dimension_numbers = #tpu.dot_dimension_numbers<[1], [0], [0], [1], [0, 0, 1, 1], [], []>} : vector<32x16xf32>, vector<16x32xf32>, vector<32x32xf32> -> vector<32x32xf32>
    %c0_3 = arith.constant 0 : index
    %c0_4 = arith.constant 0 : index
    %3 = vector.load %arg4[%c0_3, %c0_4] : memref<1x32xf32, #tpu.memory_space<vmem>>, vector<1x32xf32>
    %4 = vector.broadcast %3 : vector<1x32xf32> to vector<32x32xf32>
    %5 = arith.addf %2, %4 : vector<32x32xf32>
    %cst_5 = arith.constant 0.000000e+00 : f32
    %6 = vector.broadcast %cst_5 : f32 to vector<32x32xf32>
    %7 = arith.maximumf %5, %6 : vector<32x32xf32>
    %c0_6 = arith.constant 0 : index
    %c0_7 = arith.constant 0 : index
    %8 = vector.load %arg5[%c0_6, %c0_7] : memref<32x32xf32, #tpu.memory_space<vmem>>, vector<32x32xf32>
    tpu.vector_store %arg5[%c0_6, %c0_7], %7 {strides = array<i32>} : memref<32x32xf32, #tpu.memory_space<vmem>>, vector<32x32xf32>,
    return
  }
  func.func @transform_0(%arg0: i32, %arg1: i32) -> (i32, i32) {
    %c0_i32 = arith.constant 0 : i32
    %c0_i32_0 = arith.constant 0 : i32
    return %arg0, %c0_i32 : i32, i32
  }
  func.func @transform_1(%arg0: i32, %arg1: i32) -> (i32, i32) {
    %c0_i32 = arith.constant 0 : i32
    %c0_i32_0 = arith.constant 0 : i32
    return %c0_i32, %arg1 : i32, i32
  }
  func.func @transform_2(%arg0: i32, %arg1: i32) -> (i32, i32) {
    %c0_i32 = arith.constant 0 : i32
    %c0_i32_0 = arith.constant 0 : i32
    return %c0_i32, %arg1 : i32, i32
  }
  func.func @transform_3(%arg0: i32, %arg1: i32) -> (i32, i32) {
    %c0_i32 = arith.constant 0 : i32
    return %arg0, %arg1 : i32, i32
  }
}

</mosaic_0001>

<llo_original>
// kernel: tpu_custom_call.1
$region0: #{tpu_custom_call.1}
  #allocation0 [shape = 'u32[]', space=smem, size = 0x4, offset = 0x4, fixed_abs, tag = 'smem constant byte address 0x4 - core index']
  #allocation1 [shape = 'u32[72,128]{1,0:T(1,128)}', space=vmem, size = 0x9000, scoped, tag = 'internal scratch']
  %s0 = inlined_call_operand.vmem [shape: f32[32,16], index: 0, kind: input, shape index: {}]
  %s1 = inlined_call_operand.vmem [shape: f32[16,32], index: 1, kind: input, shape index: {}]
  %s2 = inlined_call_operand.vmem [shape: f32[1,32], index: 2, kind: input, shape index: {}]
  %s3 = inlined_call_operand.hbm [shape: f32[32,32], index: 3, kind: output, shape index: {}]
  %s4 = sld [smem:[#allocation0]]
  $region22: #{tpu_custom_call.1} parent=0
    _
  %s6 = ssub.s32 1, %s4
  %s7 = scalar_select 0, %s6, %s4
  $region1: #{tpu_custom_call.1} parent=0
    #allocation2 [shape = 'u8[16384]{0}', space=vmem, size = 0x4000, scoped, tag = 'output window, operand 0, single buffered']
    #allocation3 [shape = 's32[1]{0}', space=sflag, size = 0x4, scoped, tag = 'scoped memory for tpu_custom_call.1']
    %8 = vsyncpa [#allocation3], 0
    // Predicated region
    $region2: #{tpu_custom_call.1} parent=1 // pred_check
      _
    $region3: #{tpu_custom_call.1} parent=1 // pred_check_branch
      %10 = sbr.rel (0) target = $region5
    $region4: #{tpu_custom_call.1} parent=1 // pred_region
      _
    $region5: #{tpu_custom_call.1} parent=1 // pred_fallthru
      _
    // Predicated region
    $region6: #{tpu_custom_call.1} parent=1 // pred_check
      _
    $region7: #{tpu_custom_call.1} parent=1 // pred_check_branch
      %12 = sbr.rel (0) target = $region9
    $region8: #{tpu_custom_call.1} parent=1 // pred_region
      _
    $region9: #{tpu_custom_call.1} parent=1 // pred_fallthru
      _
    // Predicated region
    $region10: #{tpu_custom_call.1} parent=1 // pred_check
      _
    $region11: #{tpu_custom_call.1} parent=1 // pred_check_branch
      %14 = sbr.rel (0) target = $region13
    $region12: #{tpu_custom_call.1} parent=1 // pred_region
      _
    $region13: #{tpu_custom_call.1} parent=1 // pred_fallthru
      _
    %v15 = vld [vmem:[%s0] sm:$0xff]
    %v16 = vld [vmem:[%s0 + $0x8] sm:$0xff]
    %v17 = vld [vmem:[%s0 + $0x10] sm:$0xff]
    %v18 = vld [vmem:[%s0 + $0x18] sm:$0xff]
    %v19 = vld [vmem:[%s1] sm:$0xff]
    %v20 = vld [vmem:[%s1 + $0x8] sm:$0xff]
    %v21 = vld [vmem:[%s2] sm:$0x1]
    %v23 = vperm.slane %v21, 0
    %vm25 = vcmask 130048
    %v27 = vsel %vm25, %v15, 0
    %v30 = vsel %vm25, %v16, 0
    %v33 = vsel %vm25, %v17, 0
    %v36 = vsel %vm25, %v18, 0
    %38 = vmatpush.msra.mxu0 0.0
    %39 = vmatpush.msra.mxu0 0.0
    %40 = vmatpush.msra.mxu0 0.0
    %41 = vmatpush.msra.mxu0 0.0
    %42 = vmatpush.msra.mxu0 0.0
    %43 = vmatpush.msra.mxu0 0.0
    %44 = vmatpush.msra.mxu0 0.0
    %45 = vmatpush.msra.mxu0 0.0
    %46 = vmatpush.msra.mxu0 0.0
    %47 = vmatpush.msra.mxu0 0.0
    %48 = vmatpush.msra.mxu0 0.0
    %49 = vmatpush.msra.mxu0 0.0
    %50 = vmatpush.msra.mxu0 0.0
    %51 = vmatpush.msra.mxu0 0.0
    %52 = vmatpush.msra.mxu0 %v20
    %53 = vmatpush.msra.mxu0 %v19
    %54 = vmatmul.f32.gmra.mxu0 %v27
    %v55 = vpop.f32.mrf.mxu0
    %v56 = vadd.f32 %v23, %v55
    %57 = vmatmul.f32.gmra.mxu0 %v30
    %v58 = vpop.f32.mrf.mxu0
    %v59 = vadd.f32 %v23, %v58
    %60 = vmatmul.f32.gmra.mxu0 %v33
    %v61 = vpop.f32.mrf.mxu0
    %v62 = vadd.f32 %v23, %v61
    %63 = vmatmul.f32.gmra.mxu0 %v36
    %v64 = vpop.f32.mrf.mxu0
    %v65 = vadd.f32 %v23, %v64
    %66 = vdwg.mxu0
    %v67 = vmax.f32 %v56, 0.0
    %v68 = vmax.f32 %v59, 0.0
    %v69 = vmax.f32 %v62, 0.0
    %v70 = vmax.f32 %v65, 0.0
    %vm71 = vcmask 261120
    %72 = vst.msk [vmem:[#allocation2] sm:$0xff] %vm71, %v67
    %73 = vst.msk [vmem:[#allocation2 + $0x8] sm:$0xff] %vm71, %v68
    %74 = vst.msk [vmem:[#allocation2 + $0x10] sm:$0xff] %vm71, %v69
    %75 = vst.msk [vmem:[#allocation2 + $0x18] sm:$0xff] %vm71, %v70
    // Predicated region
    $region14: #{tpu_custom_call.1} parent=1 // pred_check
      _
    $region15: #{tpu_custom_call.1} parent=1 // pred_check_branch
      %77 = sbr.rel (0) target = $region17
    $region16: #{tpu_custom_call.1} parent=1 // pred_region
      %79 = vsyncadd [#allocation3], 0
      %s80 = sshll.u32 [#allocation2], 4
      %s81 = int_to_ptr.vmem [resolvable:$true] %s80
      %s82 = sshll.u32 %s3, 4
      %s83 = int_to_ptr.hbm [resolvable:$true] %s82
      %88 = dma.vmem_to_hbm [thread:$0]  %s81, 512, %s83, [#allocation3], 128, 128, 8
    $region17: #{tpu_custom_call.1} parent=1 // pred_fallthru
      _
    // Predicated region
    $region18: #{tpu_custom_call.1} parent=1 // pred_check
      _
    $region19: #{tpu_custom_call.1} parent=1 // pred_check_branch
      %90 = sbr.rel (0) target = $region21
    $region20: #{tpu_custom_call.1} parent=1 // pred_region
      %92 = dma.done [#allocation3], 512
    $region21: #{tpu_custom_call.1} parent=1 // pred_fallthru
      _
    %93 = vsyncpa [#allocation3], 1

</llo_original>
